<compile_context>
chip_gen: v7x
topology: tpu7x:2x2x1
jax: 0.10.0
libtpu: 0.0.40
codegen_flags: <defaults>
</compile_context>

<pallas_src>
import jax
import jax.numpy as jnp
import numpy as np
from jax.experimental import pallas as pl
from jax.experimental.pallas import tpu as pltpu


def _round_up(x, m):
    return ((x + m - 1) // m) * m


def _pick_lane_tile(hw, target):
    """Pick a spatial lane tile: multiple of 128, <= target, minimal padding."""
    target = max(128, int(target))
    hw128 = _round_up(hw, 128)
    if hw128 <= target:
        return hw128
    best_t, best_pad = 128, None
    t = 128
    while t <= target:
        padded = _round_up(hw, t)
        if best_pad is None or padded <= best_pad:   # ties -> larger tile
            best_t, best_pad = t, padded
        t += 128
    return best_t


# --------------------------- Pallas kernel -----------------------------------

def _deconv2x2_kernel(w_ref, b_ref, x_ref, o_ref):
    """One (batch, spatial-tile) step of the transposed-conv matmul.

    w_ref: (Np, Cin)  packed weight, Np = round_up(4*Cout, 8), resident in VMEM
    b_ref: (Np, 1)    packed bias (bias repeated over the 4 kernel taps), f32
    x_ref: (Cin, T)   spatial tile of one batch image, channels on sublanes
    o_ref: (Np, T)    packed output tile (lane-dense stores along spatial axis)
    """
    y = jnp.dot(w_ref[...], x_ref[...], preferred_element_type=jnp.float32)
    o_ref[...] = (y + b_ref[...]).astype(o_ref.dtype)


# --------------------------- wrapper ------------------------------------------

def conv_transpose2x2_pallas(x_nchw, weight, bias, *, tile_hw=2048,
                             compute_dtype=jnp.bfloat16, out_dtype=None):
    """ConvTranspose2d(Cin, Cout, kernel_size=2, stride=2, bias=True); NCHW in/out."""
    B, Cin, H, W = x_nchw.shape
    ci_w, Cout, KH, KW = weight.shape
    assert (ci_w, KH, KW) == (Cin, 2, 2), "expected ConvTranspose2d weight (Cin,Cout,2,2)"
    out_dtype = x_nchw.dtype if out_dtype is None else out_dtype

    N = KH * KW * Cout                    # packed output channels = 4*Cout
    Np = _round_up(N, 8)                  # sublane alignment only (no 128-lane waste)

    # Host-side packing, done once:
    #   W[ci, co, ky, kx] -> Wp[co*4 + ky*2 + kx, ci]   (channel-major packed axis)
    w_packed = jnp.transpose(weight, (1, 2, 3, 0)).reshape(N, Cin)
    w_packed = jnp.pad(w_packed, ((0, Np - N), (0, 0))).astype(compute_dtype)
    b_packed = jnp.pad(jnp.repeat(bias, KH * KW), (0, Np - N)).astype(jnp.float32)
    b_packed = b_packed.reshape(Np, 1)

    # Input stays channel-major: reshape is free; cast (if bf16) fuses with the pad.
    HW = H * W
    x3 = x_nchw.reshape(B, Cin, HW).astype(compute_dtype)
    T = _pick_lane_tile(HW, tile_hw)
    HW_p = _round_up(HW, T)
    if HW_p != HW:
        x3 = jnp.pad(x3, ((0, 0), (0, 0), (0, HW_p - HW)))

    in_item = np.dtype(compute_dtype).itemsize
    out_item = np.dtype(out_dtype).itemsize
    cost = pl.CostEstimate(
        flops=int(2 * B * HW * Cin * N),
        transcendentals=0,
        bytes_accessed=int(B * Cin * HW_p * in_item + Np * Cin * in_item
                           + Np * 4 + B * Np * HW_p * out_item),
    )

    y_packed = pl.pallas_call(
        _deconv2x2_kernel,
        out_shape=jax.ShapeDtypeStruct((B, Np, HW_p), out_dtype),
        grid=(B, HW_p // T),
        in_specs=[
            pl.BlockSpec((Np, Cin), lambda b, i: (0, 0)),      # weights, resident
            pl.BlockSpec((Np, 1), lambda b, i: (0, 0)),        # bias, resident
            pl.BlockSpec((None, Cin, T), lambda b, i: (b, 0, i)),
        ],
        out_specs=pl.BlockSpec((None, Np, T), lambda b, i: (b, 0, i)),
        compiler_params=pltpu.CompilerParams(
            dimension_semantics=("parallel", "parallel")),
        cost_estimate=cost,
    )(w_packed, b_packed, x3)

    # Layout plumbing (single fused XLA copy): scatter the 4 kernel taps into the
    # upsampled spatial grid and return NCHW like the PyTorch module.
    # TODO(synk): if the downstream consumer accepts the packed (B, 4*Cout, H*W)
    # layout (or NHWC), return y_packed directly and skip this copy entirely.
    y = y_packed[:, :N, :HW].reshape(B, Cout, KH, KW, H, W)
    y = jnp.transpose(y, (0, 1, 4, 2, 5, 3)).reshape(B, Cout, KH * H, KW * W)
    return y


# --------------------------- pure-JAX reference -------------------------------

def conv_transpose2x2_ref(x_nchw, weight, bias, compute_dtype=None):
    """Direct evaluation of ConvTranspose2d(k=2, s=2, bias=True) semantics."""
    if compute_dtype is not None:
        x_nchw = x_nchw.astype(compute_dtype)
        weight = weight.astype(compute_dtype)
    y = jnp.einsum('bihw,ioyx->bohywx', x_nchw, weight,
                   preferred_element_type=jnp.float32,
                   precision=jax.lax.Precision.HIGHEST)
    y = y + bias.reshape(1, -1, 1, 1, 1, 1)
    B, Cout, H, KH, W, KW = y.shape
    return y.reshape(B, Cout, KH * H, KW * W).astype(x_nchw.dtype
                                                     if compute_dtype is None
                                                     else jnp.float32)


# --------------------------------- main ---------------------------------------

if __name__ == "__main__":
    def run_case(key, B, Cin, Cout, H, W, compute_dtype, atol):
        kx, kw, kb = jax.random.split(key, 3)
        x = jax.random.normal(kx, (B, Cin, H, W), jnp.float32)
        w = jax.random.normal(kw, (Cin, Cout, 2, 2), jnp.float32) / float((Cin * 4) ** 0.5)
        b = 0.1 * jax.random.normal(kb, (Cout,), jnp.float32)

        out = jax.block_until_ready(
            conv_transpose2x2_pallas(x, w, b, compute_dtype=compute_dtype))
        assert out.shape == (B, Cout, 2 * H, 2 * W)
        assert out.dtype == x.dtype

        # Reference computed with the same operand dtype (bf16 rounding is in the
        # operands only; accumulation is f32 in both).
        ref = conv_transpose2x2_ref(x, w, b, compute_dtype=compute_dtype)
        max_err = float(jnp.max(jnp.abs(out.astype(jnp.float32) - ref.astype(jnp.float32))))
        assert jnp.allclose(out.astype(jnp.float32), ref.astype(jnp.float32),
                            atol=atol, rtol=atol), max_err

    key = jax.random.PRNGKey(0)
    k1, k2 = jax.random.split(key)

    # bf16 operands (default): packed width 4*Cout = 128 sublanes, grid (2, 1).
    run_case(k1, B=2, Cin=32, Cout=32, H=16, W=16, compute_dtype=jnp.bfloat16, atol=1e-3)
    # f32 path + small Cout (Np = 32, no 128-lane padding) + spatial padding 64 -> 128.
    run_case(k2, B=1, Cin=4, Cout=8, H=8, W=8, compute_dtype=jnp.float32, atol=1e-3)

    print("KERNEL_OK")
</pallas_src>

<mosaic_0001>
module attributes {stable_mosaic.version = 11 : i64} {
  func.func @_deconv2x2_kernel(%arg0: i32, %arg1: i32, %arg2: memref<128x32xbf16, #tpu.memory_space<vmem>>, %arg3: memref<128x1xf32, #tpu.memory_space<vmem>>, %arg4: memref<1x32x256xbf16, #tpu.memory_space<vmem>>, %arg5: memref<1x128x256xf32, #tpu.memory_space<vmem>>) attributes {dimension_semantics = [#tpu.dimension_semantics<parallel>, #tpu.dimension_semantics<parallel>], iteration_bounds = array<i64: 2, 1>, scalar_prefetch = 0 : i64, scratch_operands = 0 : i64, tpu.core_type = #tpu.core_type<tc>, window_params = [{pipeline_mode = #tpu.pipeline_mode<synchronous>, transform_indices = @transform_0, window_bounds = array<i64: 128, 32>}, {pipeline_mode = #tpu.pipeline_mode<synchronous>, transform_indices = @transform_1, window_bounds = array<i64: 128, 1>}, {transform_indices = @transform_2, window_bounds = array<i64: 1, 32, 256>}, {transform_indices = @transform_3, window_bounds = array<i64: 1, 128, 256>}]} {
    %c0 = arith.constant 0 : index
    %c0_0 = arith.constant 0 : index
    %0 = vector.load %arg2[%c0, %c0_0] : memref<128x32xbf16, #tpu.memory_space<vmem>>, vector<128x32xbf16>
    %c0_1 = arith.constant 0 : index
    %c0_2 = arith.constant 0 : index
    %c0_3 = arith.constant 0 : index
    %1 = vector.load %arg4[%c0_1, %c0_2, %c0_3] : memref<1x32x256xbf16, #tpu.memory_space<vmem>>, vector<1x32x256xbf16>
    %2 = vector.shape_cast %1 : vector<1x32x256xbf16> to vector<32x256xbf16>
    %cst = arith.constant dense<0.000000e+00> : vector<128x256xf32>
    %3 = tpu.matmul %0, %2, %cst {dimension_numbers = #tpu.dot_dimension_numbers<[1], [0], [0], [1], [0, 0, 1, 1], [], []>} : vector<128x32xbf16>, vector<32x256xbf16>, vector<128x256xf32> -> vector<128x256xf32>
    %c0_4 = arith.constant 0 : index
    %c0_5 = arith.constant 0 : index
    %4 = vector.load %arg3[%c0_4, %c0_5] : memref<128x1xf32, #tpu.memory_space<vmem>>, vector<128x1xf32>
    %5 = vector.broadcast %4 : vector<128x1xf32> to vector<128x256xf32>
    %6 = arith.addf %3, %5 : vector<128x256xf32>
    %c0_6 = arith.constant 0 : index
    %c0_7 = arith.constant 0 : index
    %c0_8 = arith.constant 0 : index
    %7 = vector.load %arg5[%c0_6, %c0_7, %c0_8] : memref<1x128x256xf32, #tpu.memory_space<vmem>>, vector<1x128x256xf32>
    %8 = vector.shape_cast %7 : vector<1x128x256xf32> to vector<128x256xf32>
    %9 = vector.shape_cast %6 : vector<128x256xf32> to vector<1x128x256xf32>
    tpu.vector_store %arg5[%c0_6, %c0_7, %c0_8], %9 {strides = array<i32>} : memref<1x128x256xf32, #tpu.memory_space<vmem>>, vector<1x128x256xf32>,
    return
  }
  func.func @transform_0(%arg0: i32, %arg1: i32) -> (i32, i32) {
    %c0_i32 = arith.constant 0 : i32
    %c0_i32_0 = arith.constant 0 : i32
    %c0_i32_1 = arith.constant 0 : i32
    return %c0_i32, %c0_i32_0 : i32, i32
  }
  func.func @transform_1(%arg0: i32, %arg1: i32) -> (i32, i32) {
    %c0_i32 = arith.constant 0 : i32
    %c0_i32_0 = arith.constant 0 : i32
    %c0_i32_1 = arith.constant 0 : i32
    return %c0_i32, %c0_i32_0 : i32, i32
  }
  func.func @transform_2(%arg0: i32, %arg1: i32) -> (i32, i32, i32) {
    %c0_i32 = arith.constant 0 : i32
    %c0_i32_0 = arith.constant 0 : i32
    return %arg0, %c0_i32, %arg1 : i32, i32, i32
  }
  func.func @transform_3(%arg0: i32, %arg1: i32) -> (i32, i32, i32) {
    %c0_i32 = arith.constant 0 : i32
    %c0_i32_0 = arith.constant 0 : i32
    return %arg0, %c0_i32, %arg1 : i32, i32, i32
  }
}

</mosaic_0001>

<llo_original>
// kernel: tpu_custom_call.1
$region0: #{tpu_custom_call.1}
  #allocation0 [shape = 'u32[]', space=smem, size = 0x4, offset = 0x4, fixed_abs, tag = 'smem constant byte address 0x4 - core index']
  #allocation1 [shape = 'u32[144,128]{1,0:T(1,128)}', space=vmem, size = 0x12000, scoped, tag = 'internal scratch']
  %s0 = inlined_call_operand.vmem [shape: bf16[128,32], index: 0, kind: input, shape index: {}]
  %s1 = inlined_call_operand.vmem [shape: f32[128,1], index: 1, kind: input, shape index: {}]
  %s2 = inlined_call_operand.vmem [shape: bf16[2,32,256], index: 2, kind: input, shape index: {}]
  %s3 = inlined_call_operand.hbm [shape: f32[2,128,256], index: 3, kind: output, shape index: {}]
  %s4 = sld [smem:[#allocation0]]
  $region45: #{tpu_custom_call.1} parent=0
    _
  %s6 = ssub.s32 1, %s4
  %s7 = scalar_select 0, %s6, %s4
  $region1: #{tpu_custom_call.1} parent=0
    #allocation2 [shape = 'u8[262144]{0}', space=vmem, size = 0x40000, scoped, tag = 'output window, operand 0']
    #allocation3 [shape = 's32[2]{0}', space=sflag, size = 0x8, scoped, tag = 'scoped memory for tpu_custom_call.1']
    %8 = vsyncpa [#allocation3], 0
    %s9 = scalar_lea.sflag [#allocation3], 1
    %10 = vsyncpa %s9, 0
    loop: start=0, step=1, limit=4
    $region2: #{tpu_custom_call.1} parent=1 // loop_pre_header
      _
    $region3: #{tpu_custom_call.1} parent=1 // loop_header
      %s12 = sphi 0, %s16
      %p13 = scmp.ge.s32.totalorder %s12, 4
      %s19 = sphi 0, %s31
      %s20 = sphi 0, %s27
      %s21 = sphi 0, %s19
      %s22 = sphi 0, %s20
      %s23 = sphi 0, %s21
      %s24 = sphi 0, %s22
      %s32 = sphi 0, %s32
      %s34 = sphi 0, %s32
      %s35 = sphi 0, %s34
      %s49 = sphi 0, %s35
      %s53 = sphi 0, %s53
      %s55 = sphi 0, %s53
      %s56 = sphi 0, %s55
      %s70 = sphi 0, %s56
      %s78 = sphi 0, %s80
      %s81 = sphi 0, %s78
      %s82 = sphi 0, %s81
      %s98 = sphi 0, %s82
      %s106 = sphi 0, %s108
      %s109 = sphi 0, %s106
      %s110 = sphi 0, %s109
      %s126 = sphi 0, %s110
    $region4: #{tpu_custom_call.1} parent=1 // loop_header_branch
      %15 = sbr.rel (%p13) target = $region8
    $region5: #{tpu_custom_call.1} parent=1 // loop_body
      %s17 = ssub.s32 %s12, 1
      %s18 = ssub.s32 %s12, 2
      %s25 = sadd.s32 1, %s20
      %p26 = scmp.ge.s32.totalorder %s25, 1
      %s27 = scalar_select %p26, 0, %s25
      %s28 = sadd.s32 1, %s19
      %s29 = scalar_select %p26, %s28, %s19
      %p30 = scmp.ge.s32.totalorder %s29, 2
      %s31 = scalar_select %p30, 0, %s29
      %s33 = sadd.s32 %s32, 1
      %p36 = scmp.eq.s32.totalorder %s12, 1
      %p37 = scmp.ne.s32.totalorder %s32, %s34
      %p38 = scmp.eq.s32.totalorder %s12, 0
      %p39 = por %p37, %p38
      %p40 = scmp.ne.s32.totalorder %s32, %s34
      %p41 = scmp.eq.s32.totalorder %s17, 1
      %p42 = por %p40, %p41
      %p43 = scmp.ne.s32.totalorder %s34, %s35
      %p44 = scmp.eq.s32.totalorder %s17, 0
      %p45 = por %p43, %p44
      %p46 = scmp.ne.s32.totalorder %s34, %s35
      %p47 = scmp.eq.s32.totalorder %s18, 1
      %p48 = por %p46, %p47
      %p50 = scmp.ne.s32.totalorder %s35, %s49
      %p51 = scmp.eq.s32.totalorder %s18, 0
      %p52 = por %p50, %p51
      %s54 = sadd.s32 %s53, 1
      %p57 = scmp.eq.s32.totalorder %s12, 1
      %p58 = scmp.ne.s32.totalorder %s53, %s55
      %p59 = scmp.eq.s32.totalorder %s12, 0
      %p60 = por %p58, %p59
      %p61 = scmp.ne.s32.totalorder %s53, %s55
      %p62 = scmp.eq.s32.totalorder %s17, 1
      %p63 = por %p61, %p62
      %p64 = scmp.ne.s32.totalorder %s55, %s56
      %p65 = scmp.eq.s32.totalorder %s17, 0
      %p66 = por %p64, %p65
      %p67 = scmp.ne.s32.totalorder %s55, %s56
      %p68 = scmp.eq.s32.totalorder %s18, 1
      %p69 = por %p67, %p68
      %p71 = scmp.ne.s32.totalorder %s56, %s70
      %p72 = scmp.eq.s32.totalorder %s18, 0
      %p73 = por %p71, %p72
      %s74 = ssub.s32 %s19, %s31
      %s75 = ssub.s32 %s20, %s27
      %s76 = sor.u32 %s74, %s75
      %p77 = scmp.eq.s32.totalorder %s76, 0
      %s79 = sadd.s32 %s78, 1
      %s80 = scalar_select %p77, %s78, %s79
      %p83 = pneg %p77
      %p84 = scmp.eq.s32.totalorder %s12, 1
      %p85 = por %p83, %p84
      %p86 = scmp.ne.s32.totalorder %s78, %s81
      %p87 = scmp.eq.s32.totalorder %s12, 0
      %p88 = por %p86, %p87
      %p89 = scmp.ne.s32.totalorder %s78, %s81
      %p90 = scmp.eq.s32.totalorder %s17, 1
      %p91 = por %p89, %p90
      %p92 = scmp.ne.s32.totalorder %s81, %s82
      %p93 = scmp.eq.s32.totalorder %s17, 0
      %p94 = por %p92, %p93
      %p95 = scmp.ne.s32.totalorder %s81, %s82
      %p96 = scmp.eq.s32.totalorder %s18, 1
      %p97 = por %p95, %p96
      %p99 = scmp.ne.s32.totalorder %s82, %s98
      %p100 = scmp.eq.s32.totalorder %s18, 0
      %p101 = por %p99, %p100
      %s102 = ssub.s32 %s19, %s31
      %s103 = ssub.s32 %s20, %s27
      %s104 = sor.u32 %s102, %s103
      %p105 = scmp.eq.s32.totalorder %s104, 0
      %s107 = sadd.s32 %s106, 1
      %s108 = scalar_select %p105, %s106, %s107
      %p111 = pneg %p105
      %p112 = scmp.eq.s32.totalorder %s12, 1
      %p113 = por %p111, %p112
      %p114 = scmp.ne.s32.totalorder %s106, %s109
      %p115 = scmp.eq.s32.totalorder %s12, 0
      %p116 = por %p114, %p115
      %p117 = scmp.ne.s32.totalorder %s106, %s109
      %p118 = scmp.eq.s32.totalorder %s17, 1
      %p119 = por %p117, %p118
      %p120 = scmp.ne.s32.totalorder %s109, %s110
      %p121 = scmp.eq.s32.totalorder %s17, 0
      %p122 = por %p120, %p121
      %p123 = scmp.ne.s32.totalorder %s109, %s110
      %p124 = scmp.eq.s32.totalorder %s18, 1
      %p125 = por %p123, %p124
      %p127 = scmp.ne.s32.totalorder %s110, %s126
      %p128 = scmp.eq.s32.totalorder %s18, 0
      %p129 = por %p127, %p128
      %p130 = scmp.le.s32.totalorder 1, %s12
      %p131 = scmp.lt.s32.totalorder %s12, 3
      %p132 = pnand %p130, %p131
      %p133 = pneg %p132
      // Predicated region
      $region9: #{tpu_custom_call.1} parent=5 // pred_check
        _
      $region10: #{tpu_custom_call.1} parent=5 // pred_check_branch
        %135 = sbr.rel (%p132) target = $region12
      $region11: #{tpu_custom_call.1} parent=5 // pred_region
        %s136 = ssub.s32 %s12, 1
        // Predicated region
        $region13: #{tpu_custom_call.1} parent=11 // pred_check
          %p137 = pneg %p45
        $region14: #{tpu_custom_call.1} parent=11 // pred_check_branch
          %139 = sbr.rel (%p137) target = $region16
        $region15: #{tpu_custom_call.1} parent=11 // pred_region
          _
        $region16: #{tpu_custom_call.1} parent=11 // pred_fallthru
          _
        // Predicated region
        $region17: #{tpu_custom_call.1} parent=11 // pred_check
          %p140 = pneg %p66
        $region18: #{tpu_custom_call.1} parent=11 // pred_check_branch
          %142 = sbr.rel (%p140) target = $region20
        $region19: #{tpu_custom_call.1} parent=11 // pred_region
          _
        $region20: #{tpu_custom_call.1} parent=11 // pred_fallthru
          _
      $region12: #{tpu_custom_call.1} parent=5 // pred_fallthru
        _
      %p143 = scmp.lt.s32.totalorder %s12, 2
      // Predicated region
      $region21: #{tpu_custom_call.1} parent=5 // pred_check
        %p144 = pneg %p143
      $region22: #{tpu_custom_call.1} parent=5 // pred_check_branch
        %146 = sbr.rel (%p144) target = $region24
      $region23: #{tpu_custom_call.1} parent=5 // pred_region
        // Predicated region
        $region25: #{tpu_custom_call.1} parent=23 // pred_check
          %p147 = pneg %p88
        $region26: #{tpu_custom_call.1} parent=23 // pred_check_branch
          %149 = sbr.rel (%p147) target = $region28
        $region27: #{tpu_custom_call.1} parent=23 // pred_region
          %s150 = smul.u32 2, %s20
          %p151 = scmp.lt.s32.totalorder %s19, 1
          %s152 = scalar_select %p151, %s19, 1
          %p153 = scmp.lt.s32.totalorder %s150, 1
          %s154 = scalar_select %p153, %s150, 1
          %s155 = smul.addr %s152, 8
          %s156 = sadd.s32 %s154, %s155
          %s157 = smul.addr %s156, 4
          %s158 = scalar_lea.vmem %s2, %s157
          %s159 = smul.u32 2, %s20
        $region28: #{tpu_custom_call.1} parent=23 // pred_fallthru
          _
      $region24: #{tpu_custom_call.1} parent=5 // pred_fallthru
        _
      %p160 = scmp.le.s32.totalorder 1, %s12
      %p161 = scmp.lt.s32.totalorder %s12, 3
      %p162 = pnand %p160, %p161
      %p163 = pneg %p162
      // Predicated region
      $region29: #{tpu_custom_call.1} parent=5 // pred_check
        _
      $region30: #{tpu_custom_call.1} parent=5 // pred_check_branch
        %165 = sbr.rel (%p162) target = $region32
      $region31: #{tpu_custom_call.1} parent=5 // pred_region
        %s166 = ssub.s32 %s12, 1
        %p167 = pneg %p45
        %p168 = pneg %p42
        %p169 = pneg %p66
        %p170 = pneg %p63
        %s171 = smul.u32 2, %s22
        %p172 = scmp.lt.s32.totalorder %s21, 1
        %s173 = scalar_select %p172, %s21, 1
        %p174 = scmp.lt.s32.totalorder %s171, 1
        %s175 = scalar_select %p174, %s171, 1
        %s176 = smul.addr %s173, 8
        %s177 = sadd.s32 %s175, %s176
        %s178 = smul.addr %s177, 4
        %s179 = scalar_lea.vmem %s2, %s178
        %p180 = pneg %p94
        %p181 = pneg %p91
        %p182 = pneg %p122
        %p183 = pneg %p119
        %s184 = sand.u32 %s109, 1
        %s185 = scalar_lea.sflag [#allocation3], %s184
        %s186 = sand.u32 %s109, 1
        %s187 = smul.addr %s186, 256
        %s188 = scalar_lea.vmem [#allocation2], %s187
        %s189 = smul.u32 2, %s22
        %p190 = scmp.lt.s32.totalorder %s21, 1
        %s191 = scalar_select %p190, %s21, 1
        %p192 = scmp.lt.s32.totalorder %s189, 1
        %s193 = scalar_select %p192, %s189, 1
        %s194 = smul.addr %s191, 8
        %s195 = sadd.s32 %s193, %s194
        %s196 = smul.addr %s195, 4
        %s197 = scalar_lea.vmem %s2, %s196
        %s198 = smul.u32 2, %s22
        %s199 = smul.u32 2, %s22
        %v201 = vld [vmem:[%s0] sm:$0xf]
        %v202 = vld [vmem:[%s0 + $0x4] sm:$0xf]
        %v203 = vld [vmem:[%s0 + $0x8] sm:$0xf]
        %v204 = vld [vmem:[%s0 + $0xc] sm:$0xf]
        %v205 = vld [vmem:[%s0 + $0x10] sm:$0xf]
        %v206 = vld [vmem:[%s0 + $0x14] sm:$0xf]
        %v207 = vld [vmem:[%s0 + $0x18] sm:$0xf]
        %v208 = vld [vmem:[%s0 + $0x1c] sm:$0xf]
        %v209 = vld [vmem:[%s0 + $0x20] sm:$0xf]
        %v210 = vld [vmem:[%s0 + $0x24] sm:$0xf]
        %v211 = vld [vmem:[%s0 + $0x28] sm:$0xf]
        %v212 = vld [vmem:[%s0 + $0x2c] sm:$0xf]
        %v213 = vld [vmem:[%s0 + $0x30] sm:$0xf]
        %v214 = vld [vmem:[%s0 + $0x34] sm:$0xf]
        %v215 = vld [vmem:[%s0 + $0x38] sm:$0xf]
        %v216 = vld [vmem:[%s0 + $0x3c] sm:$0xf]
        %v217 = vld [vmem:[%s197] sm:$0xff]
        %v218 = vld [vmem:[%s197 + $0x8] sm:$0xff]
        %v219 = vld [vmem:[%s197 + $0x10] sm:$0xff]
        %v220 = vld [vmem:[%s197 + $0x18] sm:$0xff]
        %v221 = vld [vmem:[%s1] sm:$0xff]
        %v222 = vld [vmem:[%s1 + $0x8] sm:$0xff]
        %v223 = vld [vmem:[%s1 + $0x10] sm:$0xff]
        %v224 = vld [vmem:[%s1 + $0x18] sm:$0xff]
        %v225 = vld [vmem:[%s1 + $0x20] sm:$0xff]
        %v226 = vld [vmem:[%s1 + $0x28] sm:$0xff]
        %v227 = vld [vmem:[%s1 + $0x30] sm:$0xff]
        %v228 = vld [vmem:[%s1 + $0x38] sm:$0xff]
        %v229 = vld [vmem:[%s1 + $0x40] sm:$0xff]
        %v230 = vld [vmem:[%s1 + $0x48] sm:$0xff]
        %v231 = vld [vmem:[%s1 + $0x50] sm:$0xff]
        %v232 = vld [vmem:[%s1 + $0x58] sm:$0xff]
        %v233 = vld [vmem:[%s1 + $0x60] sm:$0xff]
        %v234 = vld [vmem:[%s1 + $0x68] sm:$0xff]
        %v235 = vld [vmem:[%s1 + $0x70] sm:$0xff]
        %v236 = vld [vmem:[%s1 + $0x78] sm:$0xff]
        %238 = vset.pattern.permute.xlu0 0
        %239 = vperm.xlu0 %238, %v221
        %v240 = vpop.permute.xlu0 %239
        %243 = vset.pattern.permute.xlu0 0
        %244 = vperm.xlu0 %243, %v222
        %v245 = vpop.permute.xlu0 %244
        %248 = vset.pattern.permute.xlu0 0
        %249 = vperm.xlu0 %248, %v223
        %v250 = vpop.permute.xlu0 %249
        %253 = vset.pattern.permute.xlu0 0
        %254 = vperm.xlu0 %253, %v224
        %v255 = vpop.permute.xlu0 %254
        %258 = vset.pattern.permute.xlu0 0
        %259 = vperm.xlu0 %258, %v225
        %v260 = vpop.permute.xlu0 %259
        %263 = vset.pattern.permute.xlu0 0
        %264 = vperm.xlu0 %263, %v226
        %v265 = vpop.permute.xlu0 %264
        %268 = vset.pattern.permute.xlu0 0
        %269 = vperm.xlu0 %268, %v227
        %v270 = vpop.permute.xlu0 %269
        %273 = vset.pattern.permute.xlu0 0
        %274 = vperm.xlu0 %273, %v228
        %v275 = vpop.permute.xlu0 %274
        %278 = vset.pattern.permute.xlu0 0
        %279 = vperm.xlu0 %278, %v229
        %v280 = vpop.permute.xlu0 %279
        %283 = vset.pattern.permute.xlu0 0
        %284 = vperm.xlu0 %283, %v230
        %v285 = vpop.permute.xlu0 %284
        %288 = vset.pattern.permute.xlu0 0
        %289 = vperm.xlu0 %288, %v231
        %v290 = vpop.permute.xlu0 %289
        %293 = vset.pattern.permute.xlu0 0
        %294 = vperm.xlu0 %293, %v232
        %v295 = vpop.permute.xlu0 %294
        %298 = vset.pattern.permute.xlu0 0
        %299 = vperm.xlu0 %298, %v233
        %v300 = vpop.permute.xlu0 %299
        %303 = vset.pattern.permute.xlu0 0
        %304 = vperm.xlu0 %303, %v234
        %v305 = vpop.permute.xlu0 %304
        %308 = vset.pattern.permute.xlu0 0
        %309 = vperm.xlu0 %308, %v235
        %v310 = vpop.permute.xlu0 %309
        %313 = vset.pattern.permute.xlu0 0
        %314 = vperm.xlu0 %313, %v236
        %v315 = vpop.permute.xlu0 %314
        %v333 = vunpack.c.l.b16 %v201
        %v334 = vunpack.c.l.b16 %v202
        %v335 = vunpack.c.l.b16 %v203
        %v336 = vunpack.c.l.b16 %v204
        %v337 = vunpack.c.l.b16 %v205
        %v338 = vunpack.c.l.b16 %v206
        %v339 = vunpack.c.l.b16 %v207
        %v340 = vunpack.c.l.b16 %v208
        %v341 = vunpack.c.l.b16 %v209
        %v342 = vunpack.c.l.b16 %v210
        %v343 = vunpack.c.l.b16 %v211
        %v344 = vunpack.c.l.b16 %v212
        %v345 = vunpack.c.l.b16 %v213
        %v346 = vunpack.c.l.b16 %v214
        %v347 = vunpack.c.l.b16 %v215
        %v348 = vunpack.c.l.b16 %v216
        %v349 = vpack.c.b16 %v334, %v333
        %v350 = vpack.c.b16 %v336, %v335
        %v351 = vpack.c.b16 %v338, %v337
        %v352 = vpack.c.b16 %v340, %v339
        %v353 = vpack.c.b16 %v342, %v341
        %v354 = vpack.c.b16 %v344, %v343
        %v355 = vpack.c.b16 %v346, %v345
        %v356 = vpack.c.b16 %v348, %v347
        %v361 = vunpack.c.l.b16 %v217
        %v362 = vunpack.c.h.b16 %v217
        %v363 = vunpack.c.l.b16 %v218
        %v364 = vunpack.c.h.b16 %v218
        %v365 = vunpack.c.l.b16 %v219
        %v366 = vunpack.c.h.b16 %v219
        %v367 = vunpack.c.l.b16 %v220
        %v368 = vunpack.c.h.b16 %v220
        %v369 = vpack.c.b16 %v363, %v361
        %v370 = vpack.c.b16 %v364, %v362
        %v371 = vpack.c.b16 %v367, %v365
        %v372 = vpack.c.b16 %v368, %v366
        %vm377 = vcmask 261120
        %v379 = vsel %vm377, %v349, 0
        %v382 = vsel %vm377, %v350, 0
        %v385 = vsel %vm377, %v351, 0
        %v388 = vsel %vm377, %v352, 0
        %v391 = vsel %vm377, %v353, 0
        %v394 = vsel %vm377, %v354, 0
        %v397 = vsel %vm377, %v355, 0
        %v400 = vsel %vm377, %v356, 0
        %402 = vmatprep.subr.bf16.mxu0 %v370
        %403 = vmatpush1.bf16.msra.mxu0 %v369
        %404 = vmatprep.subr.bf16.mxu0 %v372
        %405 = vmatpush1.bf16.msra.mxu0 %v371
        %406 = vmatprep.subr.bf16.mxu0 0
        %407 = vmatpush1.bf16.msra.mxu0 0
        %408 = vmatprep.subr.bf16.mxu0 0
        %409 = vmatpush1.bf16.msra.mxu0 0
        %410 = vmatprep.subr.bf16.mxu0 0
        %411 = vmatpush1.bf16.msra.mxu0 0
        %412 = vmatprep.subr.bf16.mxu0 0
        %413 = vmatpush1.bf16.msra.mxu0 0
        %414 = vmatprep.subr.bf16.mxu0 0
        %415 = vmatpush1.bf16.msra.mxu0 0
        %416 = vmatprep.subr.bf16.mxu0 0
        %417 = vmatpush1.bf16.msra.mxu0 0
        %418 = vmatprep.subr.bf16.mxu0 0
        %419 = vmatpush1.bf16.msra.mxu0 0
        %420 = vmatprep.subr.bf16.mxu0 0
        %421 = vmatpush1.bf16.msra.mxu0 0
        %422 = vmatprep.subr.bf16.mxu0 0
        %423 = vmatpush1.bf16.msra.mxu0 0
        %424 = vmatprep.subr.bf16.mxu0 0
        %425 = vmatpush1.bf16.msra.mxu0 0
        %426 = vmatprep.subr.bf16.mxu0 0
        %427 = vmatpush1.bf16.msra.mxu0 0
        %428 = vmatprep.subr.bf16.mxu0 0
        %429 = vmatpush1.bf16.msra.mxu0 0
        %430 = vmatprep.subr.bf16.mxu0 0
        %431 = vmatpush1.bf16.msra.mxu0 0
        %432 = vmatprep.subr.bf16.mxu0 0
        %433 = vmatpush1.bf16.msra.mxu0 0
        %434 = vmatprep.mubr.bf16.mxu0 0
        %435 = vmatmul.mubr.bf16.gmra.mrb[0].mxu0 %v379
        %v436 = vpop.f32.mrb[0].mxu0
        %v437 = vadd.f32 %v240, %v436
        %v438 = vpop.f32.mrb[0].mxu0
        %v439 = vadd.f32 %v240, %v438
        %v440 = vpop.f32.mrb[0].mxu0
        %v441 = vadd.f32 %v245, %v440
        %v442 = vpop.f32.mrb[0].mxu0
        %v443 = vadd.f32 %v245, %v442
        %444 = vmatprep.mubr.bf16.mxu0 0
        %445 = vmatmul.mubr.bf16.gmra.mrb[0].mxu0 %v382
        %v446 = vpop.f32.mrb[0].mxu0
        %v447 = vadd.f32 %v250, %v446
        %v448 = vpop.f32.mrb[0].mxu0
        %v449 = vadd.f32 %v250, %v448
        %v450 = vpop.f32.mrb[0].mxu0
        %v451 = vadd.f32 %v255, %v450
        %v452 = vpop.f32.mrb[0].mxu0
        %v453 = vadd.f32 %v255, %v452
        %454 = vmatprep.mubr.bf16.mxu0 0
        %455 = vmatmul.mubr.bf16.gmra.mrb[0].mxu0 %v385
        %v456 = vpop.f32.mrb[0].mxu0
        %v457 = vadd.f32 %v260, %v456
        %v458 = vpop.f32.mrb[0].mxu0
        %v459 = vadd.f32 %v260, %v458
        %v460 = vpop.f32.mrb[0].mxu0
        %v461 = vadd.f32 %v265, %v460
        %v462 = vpop.f32.mrb[0].mxu0
        %v463 = vadd.f32 %v265, %v462
        %464 = vmatprep.mubr.bf16.mxu0 0
        %465 = vmatmul.mubr.bf16.gmra.mrb[0].mxu0 %v388
        %v466 = vpop.f32.mrb[0].mxu0
        %v467 = vadd.f32 %v270, %v466
        %v468 = vpop.f32.mrb[0].mxu0
        %v469 = vadd.f32 %v270, %v468
        %v470 = vpop.f32.mrb[0].mxu0
        %v471 = vadd.f32 %v275, %v470
        %v472 = vpop.f32.mrb[0].mxu0
        %v473 = vadd.f32 %v275, %v472
        %474 = vmatprep.mubr.bf16.mxu0 0
        %475 = vmatmul.mubr.bf16.gmra.mrb[0].mxu0 %v391
        %v476 = vpop.f32.mrb[0].mxu0
        %v477 = vadd.f32 %v280, %v476
        %v478 = vpop.f32.mrb[0].mxu0
        %v479 = vadd.f32 %v280, %v478
        %v480 = vpop.f32.mrb[0].mxu0
        %v481 = vadd.f32 %v285, %v480
        %v482 = vpop.f32.mrb[0].mxu0
        %v483 = vadd.f32 %v285, %v482
        %484 = vmatprep.mubr.bf16.mxu0 0
        %485 = vmatmul.mubr.bf16.gmra.mrb[0].mxu0 %v394
        %v486 = vpop.f32.mrb[0].mxu0
        %v487 = vadd.f32 %v290, %v486
        %v488 = vpop.f32.mrb[0].mxu0
        %v489 = vadd.f32 %v290, %v488
        %v490 = vpop.f32.mrb[0].mxu0
        %v491 = vadd.f32 %v295, %v490
        %v492 = vpop.f32.mrb[0].mxu0
        %v493 = vadd.f32 %v295, %v492
        %494 = vmatprep.mubr.bf16.mxu0 0
        %495 = vmatmul.mubr.bf16.gmra.mrb[0].mxu0 %v397
        %v496 = vpop.f32.mrb[0].mxu0
        %v497 = vadd.f32 %v300, %v496
        %v498 = vpop.f32.mrb[0].mxu0
        %v499 = vadd.f32 %v300, %v498
        %v500 = vpop.f32.mrb[0].mxu0
        %v501 = vadd.f32 %v305, %v500
        %v502 = vpop.f32.mrb[0].mxu0
        %v503 = vadd.f32 %v305, %v502
        %504 = vmatprep.mubr.bf16.mxu0 0
        %505 = vmatmul.mubr.bf16.gmra.mrb[0].mxu0 %v400
        %v506 = vpop.f32.mrb[0].mxu0
        %v507 = vadd.f32 %v310, %v506
        %v508 = vpop.f32.mrb[0].mxu0
        %v509 = vadd.f32 %v310, %v508
        %v510 = vpop.f32.mrb[0].mxu0
        %v511 = vadd.f32 %v315, %v510
        %v512 = vpop.f32.mrb[0].mxu0
        %v513 = vadd.f32 %v315, %v512
        %514 = vdwg.mxu0
        %515 = vst [vmem:[%s188] sm:$0xff] %v437
        %516 = vst [vmem:[%s188 + $0x8] sm:$0xff] %v439
        %517 = vst [vmem:[%s188 + $0x10] sm:$0xff] %v441
        %518 = vst [vmem:[%s188 + $0x18] sm:$0xff] %v443
        %519 = vst [vmem:[%s188 + $0x20] sm:$0xff] %v447
        %520 = vst [vmem:[%s188 + $0x28] sm:$0xff] %v449
        %521 = vst [vmem:[%s188 + $0x30] sm:$0xff] %v451
        %522 = vst [vmem:[%s188 + $0x38] sm:$0xff] %v453
        %523 = vst [vmem:[%s188 + $0x40] sm:$0xff] %v457
        %524 = vst [vmem:[%s188 + $0x48] sm:$0xff] %v459
        %525 = vst [vmem:[%s188 + $0x50] sm:$0xff] %v461
        %526 = vst [vmem:[%s188 + $0x58] sm:$0xff] %v463
        %527 = vst [vmem:[%s188 + $0x60] sm:$0xff] %v467
        %528 = vst [vmem:[%s188 + $0x68] sm:$0xff] %v469
        %529 = vst [vmem:[%s188 + $0x70] sm:$0xff] %v471
        %530 = vst [vmem:[%s188 + $0x78] sm:$0xff] %v473
        %531 = vst [vmem:[%s188 + $0x80] sm:$0xff] %v477
        %532 = vst [vmem:[%s188 + $0x88] sm:$0xff] %v479
        %533 = vst [vmem:[%s188 + $0x90] sm:$0xff] %v481
        %534 = vst [vmem:[%s188 + $0x98] sm:$0xff] %v483
        %535 = vst [vmem:[%s188 + $0xa0] sm:$0xff] %v487
        %536 = vst [vmem:[%s188 + $0xa8] sm:$0xff] %v489
        %537 = vst [vmem:[%s188 + $0xb0] sm:$0xff] %v491
        %538 = vst [vmem:[%s188 + $0xb8] sm:$0xff] %v493
        %539 = vst [vmem:[%s188 + $0xc0] sm:$0xff] %v497
        %540 = vst [vmem:[%s188 + $0xc8] sm:$0xff] %v499
        %541 = vst [vmem:[%s188 + $0xd0] sm:$0xff] %v501
        %542 = vst [vmem:[%s188 + $0xd8] sm:$0xff] %v503
        %543 = vst [vmem:[%s188 + $0xe0] sm:$0xff] %v507
        %544 = vst [vmem:[%s188 + $0xe8] sm:$0xff] %v509
        %545 = vst [vmem:[%s188 + $0xf0] sm:$0xff] %v511
        %546 = vst [vmem:[%s188 + $0xf8] sm:$0xff] %v513
        %s547 = sand.u32 %s109, 1
        %s548 = scalar_lea.sflag [#allocation3], %s547
        %s549 = sand.u32 %s109, 1
        %s550 = smul.addr %s549, 256
        %s551 = scalar_lea.vmem [#allocation2], %s550
        // Predicated region
        $region33: #{tpu_custom_call.1} parent=31 // pred_check
          %p552 = pneg %p119
        $region34: #{tpu_custom_call.1} parent=31 // pred_check_branch
          %554 = sbr.rel (%p552) target = $region36
        $region35: #{tpu_custom_call.1} parent=31 // pred_region
          %s555 = smul.u32 2, %s22
          %s557 = ssub.s32 4096, 4096
          %558 = vsyncadd %s548, %s557
          %s559 = smul.addr %s21, 32
          %s560 = sadd.s32 %s555, %s559
          %s561 = smul.addr %s560, 128
          %s562 = scalar_lea.hbm %s3, %s561
          %s563 = sshll.u32 %s551, 4
          %s564 = int_to_ptr.vmem [resolvable:$true] %s563
          %569 = dma.vmem_to_hbm [thread:$0]  %s564, 4096, %s562, %s548, 256, 256, 16
        $region36: #{tpu_custom_call.1} parent=31 // pred_fallthru
          _
      $region32: #{tpu_custom_call.1} parent=5 // pred_fallthru
        _
      %p570 = scmp.le.s32.totalorder 2, %s12
      // Predicated region
      $region37: #{tpu_custom_call.1} parent=5 // pred_check
        %p571 = pneg %p570
      $region38: #{tpu_custom_call.1} parent=5 // pred_check_branch
        %573 = sbr.rel (%p571) target = $region40
      $region39: #{tpu_custom_call.1} parent=5 // pred_region
        %s574 = ssub.s32 %s12, 2
        // Predicated region
        $region41: #{tpu_custom_call.1} parent=39 // pred_check
          %p575 = pneg %p125
        $region42: #{tpu_custom_call.1} parent=39 // pred_check_branch
          %577 = sbr.rel (%p575) target = $region44
        $region43: #{tpu_custom_call.1} parent=39 // pred_region
          %s578 = sand.u32 %s110, 1
          %s579 = scalar_lea.sflag [#allocation3], %s578
          %s580 = sand.u32 %s110, 1
          %s581 = smul.addr %s580, 256
          %s582 = scalar_lea.vmem [#allocation2], %s581
          %583 = dma.done %s579, 4096
        $region44: #{tpu_custom_call.1} parent=39 // pred_fallthru
          _
      $region40: #{tpu_custom_call.1} parent=5 // pred_fallthru
        _
    $region6: #{tpu_custom_call.1} parent=1 // loop_footer
      %s16 = sadd.s32 1, %s12
    $region7: #{tpu_custom_call.1} parent=1 // loop_footer_branch
      %11 = sbr.rel target = $region3
    $region8: #{tpu_custom_call.1} parent=1 // loop_exit
      _
    %584 = vsyncpa [#allocation3], 1
    %s585 = scalar_lea.sflag [#allocation3], 1
    %586 = vsyncpa %s585, 1

</llo_original>
